<compile_context>
chip_gen: v5e
topology: v5e:2x2
jax: 0.10.0
libtpu: 0.0.40
codegen_flags: <defaults>
</compile_context>

<pallas_src>
import jax
import jax.numpy as jnp
import numpy as np
from jax.experimental import pallas as pl
from jax.experimental.pallas import tpu as pltpu


def _round_up(x, m):
    return ((x + m - 1) // m) * m


def mlp_kernel(x_ref, w1_ref, b1_ref, w2_ref, b2_ref, o_ref):
    # fc1: (tb, F) @ (F, Hp) on the MXU, f32 accumulation.
    h = jnp.dot(x_ref[...], w1_ref[...], preferred_element_type=jnp.float32)
    # Bias + ReLU in f32 on the VPU. Padded hidden columns stay exactly 0.
    h = jnp.maximum(h + b1_ref[...], 0.0)
    # fc2: (tb, Hp) @ (Hp, Qp); cast h back to the compute dtype (bf16 on the
    # fast path) so the second matmul also runs at full MXU rate, f32 acc.
    out = jnp.dot(h.astype(w2_ref.dtype), w2_ref[...],
                  preferred_element_type=jnp.float32)
    out = out + b2_ref[...]
    o_ref[...] = out.astype(o_ref.dtype)


def red_neuronal_forward(x, w1, b1, w2, b2, *, tb=1024,
                         compute_dtype=jnp.bfloat16):
    """Fused MLP forward (fc1 -> relu -> fc2) as a single Pallas TPU kernel.

    x : (B, F)   w1: (F, H)   b1: (H,)   w2: (H, Q)   b2: (Q,)
    returns (B, Q) in x.dtype (f32 accumulation inside the kernel).
    """
    B, F = x.shape
    H = w1.shape[1]
    Q = w2.shape[1]
    out_dtype = x.dtype

    # ---- lane-dense padding of the hidden and output dims to 128 ----------
    Hp = _round_up(H, 128)
    Qp = _round_up(Q, 128)

    # ---- batch tiling: multiple of 8, capped at the (padded) batch --------
    Bp8 = _round_up(B, 8)
    tb_eff = min(_round_up(tb, 8), Bp8)
    # v7x has 2 TensorCores/chip sharing the grid along "parallel" axes: keep
    # at least 2 grid steps whenever the batch is big enough to split.
    if Bp8 > 8 and (Bp8 + tb_eff - 1) // tb_eff < 2:
        tb_eff = _round_up(pl.cdiv(Bp8, 2), 8)
    Bp = _round_up(B, tb_eff)

    # ---- zero-pad operands (padding contributes exactly 0 to the result) --
    xp = x
    if Bp != B:
        xp = jnp.zeros((Bp, F), dtype=x.dtype).at[:B, :].set(x)
    w1p = jnp.zeros((F, Hp), dtype=w1.dtype).at[:, :H].set(w1)
    b1p = jnp.zeros((1, Hp), dtype=jnp.float32).at[0, :H].set(b1.astype(jnp.float32))
    w2p = jnp.zeros((Hp, Qp), dtype=w2.dtype).at[:H, :Q].set(w2)
    b2p = jnp.zeros((1, Qp), dtype=jnp.float32).at[0, :Q].set(b2.astype(jnp.float32))

    # bf16 (by default) operands for the MXU / halved x HBM stream; biases f32.
    xp = xp.astype(compute_dtype)
    w1p = w1p.astype(compute_dtype)
    w2p = w2p.astype(compute_dtype)

    grid = (Bp // tb_eff,)

    def make_call(single_buffer_residents):
        if single_buffer_residents:
            def resident(shape):
                return pl.BlockSpec(shape, lambda i: (0, 0),
                                    pipeline_mode=pl.Buffered(buffer_count=1))
        else:
            def resident(shape):
                return pl.BlockSpec(shape, lambda i: (0, 0))
        return pl.pallas_call(
            mlp_kernel,
            out_shape=jax.ShapeDtypeStruct((Bp, Qp), out_dtype),
            grid_spec=pltpu.PrefetchScalarGridSpec(
                num_scalar_prefetch=0,
                grid=grid,
                in_specs=[
                    pl.BlockSpec((tb_eff, F), lambda i: (i, 0)),  # x streamed over batch
                    resident((F, Hp)),      # W1 resident
                    resident((1, Hp)),      # b1 resident
                    resident((Hp, Qp)),     # W2 resident
                    resident((1, Qp)),      # b2 resident
                ],
                out_specs=pl.BlockSpec((tb_eff, Qp), lambda i: (i, 0)),
            ),
            compiler_params=pltpu.CompilerParams(
                dimension_semantics=("parallel",),
            ),
        )

    try:
        out_p = make_call(True)(xp, w1p, b1p, w2p, b2p)
    except Exception:
        # Fallback: let Pallas use its default buffering for the residents.
        out_p = make_call(False)(xp, w1p, b1p, w2p, b2p)

    # Strip batch / lane padding outside the kernel (cheap XLA slice).
    return out_p[:B, :Q]


def reference_forward_np(x, w1, b1, w2, b2):
    # Exact float64 reference on host.
    xn = np.asarray(x, dtype=np.float64)
    w1n = np.asarray(w1, dtype=np.float64)
    b1n = np.asarray(b1, dtype=np.float64)
    w2n = np.asarray(w2, dtype=np.float64)
    b2n = np.asarray(b2, dtype=np.float64)
    h = np.maximum(xn @ w1n + b1n, 0.0)
    return h @ w2n + b2n


if __name__ == "__main__":
    # Shapes implied by RedNeuronal(cant_neuronas, dim_features, quantiles):
    batch = 8
    dim_features = 32
    cant_neuronas = 64
    quantiles = (0.1, 0.5, 0.9)
    dim_quantiles = len(quantiles)

    key = jax.random.PRNGKey(0)
    kx, kw1, kb1, kw2, kb2 = jax.random.split(key, 5)

    x = jax.random.normal(kx, (batch, dim_features), dtype=jnp.float32)
    # PyTorch fc1.weight is (H, F); we store its transpose directly.
    w1 = jax.random.normal(kw1, (dim_features, cant_neuronas), dtype=jnp.float32) * 0.1
    b1 = jax.random.normal(kb1, (cant_neuronas,), dtype=jnp.float32) * 0.1
    w2 = jax.random.normal(kw2, (cant_neuronas, dim_quantiles), dtype=jnp.float32) * 0.1
    b2 = jax.random.normal(kb2, (dim_quantiles,), dtype=jnp.float32) * 0.1

    ref = reference_forward_np(x, w1, b1, w2, b2)

    # Fast path: bf16 operands on the MXU, f32 accumulation.
    out = red_neuronal_forward(x, w1, b1, w2, b2)
    out = jax.block_until_ready(out)
    assert out.shape == (batch, dim_quantiles)
    assert out.dtype == jnp.float32
    assert np.allclose(np.asarray(out), ref, atol=3e-2, rtol=3e-2), "bf16 path mismatch"

    # Full-f32 path for a tighter numerical check of the fused kernel.
    out_f32 = red_neuronal_forward(x, w1, b1, w2, b2, compute_dtype=jnp.float32)
    out_f32 = jax.block_until_ready(out_f32)
    assert np.allclose(np.asarray(out_f32), ref, atol=1e-2, rtol=1e-2), "f32 path mismatch"

    print("KERNEL_OK")
</pallas_src>

<mosaic_0001>
module attributes {stable_mosaic.version = 11 : i64} {
  func.func @mlp_kernel(%arg0: i32, %arg1: memref<8x32xbf16, #tpu.memory_space<vmem>>, %arg2: memref<32x128xbf16, #tpu.memory_space<vmem>>, %arg3: memref<1x128xf32, #tpu.memory_space<vmem>>, %arg4: memref<128x128xbf16, #tpu.memory_space<vmem>>, %arg5: memref<1x128xf32, #tpu.memory_space<vmem>>, %arg6: memref<8x128xf32, #tpu.memory_space<vmem>>) attributes {dimension_semantics = [#tpu.dimension_semantics<parallel>], iteration_bounds = array<i64: 1>, scalar_prefetch = 0 : i64, scratch_operands = 0 : i64, tpu.core_type = #tpu.core_type<tc>, window_params = [{transform_indices = @transform_0, window_bounds = array<i64: 8, 32>}, {pipeline_mode = #tpu.pipeline_mode<synchronous>, transform_indices = @transform_1, window_bounds = array<i64: 32, 128>}, {pipeline_mode = #tpu.pipeline_mode<synchronous>, transform_indices = @transform_2, window_bounds = array<i64: 1, 128>}, {pipeline_mode = #tpu.pipeline_mode<synchronous>, transform_indices = @transform_3, window_bounds = array<i64: 128, 128>}, {pipeline_mode = #tpu.pipeline_mode<synchronous>, transform_indices = @transform_4, window_bounds = array<i64: 1, 128>}, {transform_indices = @transform_5, window_bounds = array<i64: 8, 128>}]} {
    %c0 = arith.constant 0 : index
    %c0_0 = arith.constant 0 : index
    %0 = vector.load %arg1[%c0, %c0_0] : memref<8x32xbf16, #tpu.memory_space<vmem>>, vector<8x32xbf16>
    %c0_1 = arith.constant 0 : index
    %c0_2 = arith.constant 0 : index
    %1 = vector.load %arg2[%c0_1, %c0_2] : memref<32x128xbf16, #tpu.memory_space<vmem>>, vector<32x128xbf16>
    %cst = arith.constant dense<0.000000e+00> : vector<8x128xf32>
    %2 = tpu.matmul %0, %1, %cst {dimension_numbers = #tpu.dot_dimension_numbers<[1], [0], [0], [1], [0, 0, 1, 1], [], []>} : vector<8x32xbf16>, vector<32x128xbf16>, vector<8x128xf32> -> vector<8x128xf32>
    %c0_3 = arith.constant 0 : index
    %c0_4 = arith.constant 0 : index
    %3 = vector.load %arg3[%c0_3, %c0_4] : memref<1x128xf32, #tpu.memory_space<vmem>>, vector<1x128xf32>
    %4 = vector.broadcast %3 : vector<1x128xf32> to vector<8x128xf32>
    %5 = arith.addf %2, %4 : vector<8x128xf32>
    %cst_5 = arith.constant 0.000000e+00 : f32
    %6 = vector.broadcast %cst_5 : f32 to vector<8x128xf32>
    %7 = arith.maximumf %5, %6 : vector<8x128xf32>
    %8 = arith.truncf %7 : vector<8x128xf32> to vector<8x128xbf16>
    %c0_6 = arith.constant 0 : index
    %c0_7 = arith.constant 0 : index
    %9 = vector.load %arg4[%c0_6, %c0_7] : memref<128x128xbf16, #tpu.memory_space<vmem>>, vector<128x128xbf16>
    %cst_8 = arith.constant dense<0.000000e+00> : vector<8x128xf32>
    %10 = tpu.matmul %8, %9, %cst_8 {dimension_numbers = #tpu.dot_dimension_numbers<[1], [0], [0], [1], [0, 0, 1, 1], [], []>} : vector<8x128xbf16>, vector<128x128xbf16>, vector<8x128xf32> -> vector<8x128xf32>
    %c0_9 = arith.constant 0 : index
    %c0_10 = arith.constant 0 : index
    %11 = vector.load %arg5[%c0_9, %c0_10] : memref<1x128xf32, #tpu.memory_space<vmem>>, vector<1x128xf32>
    %12 = vector.broadcast %11 : vector<1x128xf32> to vector<8x128xf32>
    %13 = arith.addf %10, %12 : vector<8x128xf32>
    %c0_11 = arith.constant 0 : index
    %c0_12 = arith.constant 0 : index
    %14 = vector.load %arg6[%c0_11, %c0_12] : memref<8x128xf32, #tpu.memory_space<vmem>>, vector<8x128xf32>
    tpu.vector_store %arg6[%c0_11, %c0_12], %13 {strides = array<i32>} : memref<8x128xf32, #tpu.memory_space<vmem>>, vector<8x128xf32>,
    return
  }
  func.func @transform_0(%arg0: i32) -> (i32, i32) {
    %c0_i32 = arith.constant 0 : i32
    %c0_i32_0 = arith.constant 0 : i32
    return %arg0, %c0_i32 : i32, i32
  }
  func.func @transform_1(%arg0: i32) -> (i32, i32) {
    %c0_i32 = arith.constant 0 : i32
    %c0_i32_0 = arith.constant 0 : i32
    %c0_i32_1 = arith.constant 0 : i32
    return %c0_i32, %c0_i32_0 : i32, i32
  }
  func.func @transform_2(%arg0: i32) -> (i32, i32) {
    %c0_i32 = arith.constant 0 : i32
    %c0_i32_0 = arith.constant 0 : i32
    %c0_i32_1 = arith.constant 0 : i32
    return %c0_i32, %c0_i32_0 : i32, i32
  }
  func.func @transform_3(%arg0: i32) -> (i32, i32) {
    %c0_i32 = arith.constant 0 : i32
    %c0_i32_0 = arith.constant 0 : i32
    %c0_i32_1 = arith.constant 0 : i32
    return %c0_i32, %c0_i32_0 : i32, i32
  }
  func.func @transform_4(%arg0: i32) -> (i32, i32) {
    %c0_i32 = arith.constant 0 : i32
    %c0_i32_0 = arith.constant 0 : i32
    %c0_i32_1 = arith.constant 0 : i32
    return %c0_i32, %c0_i32_0 : i32, i32
  }
  func.func @transform_5(%arg0: i32) -> (i32, i32) {
    %c0_i32 = arith.constant 0 : i32
    %c0_i32_0 = arith.constant 0 : i32
    return %arg0, %c0_i32 : i32, i32
  }
}

module attributes {stable_mosaic.version = 11 : i64} {
  func.func @mlp_kernel(%arg0: i32, %arg1: memref<8x32xbf16, #tpu.memory_space<vmem>>, %arg2: memref<32x128xbf16, #tpu.memory_space<vmem>>, %arg3: memref<1x128xf32, #tpu.memory_space<vmem>>, %arg4: memref<128x128xbf16, #tpu.memory_space<vmem>>, %arg5: memref<1x128xf32, #tpu.memory_space<vmem>>, %arg6: memref<8x128xf32, #tpu.memory_space<vmem>>) attributes {dimension_semantics = [#tpu.dimension_semantics<parallel>], iteration_bounds = array<i64: 1>, scalar_prefetch = 0 : i64, scratch_operands = 0 : i64, tpu.core_type = #tpu.core_type<tc>, window_params = [{transform_indices = @transform_0, window_bounds = array<i64: 8, 32>}, {pipeline_mode = #tpu.pipeline_mode<synchronous>, transform_indices = @transform_1, window_bounds = array<i64: 32, 128>}, {pipeline_mode = #tpu.pipeline_mode<synchronous>, transform_indices = @transform_2, window_bounds = array<i64: 1, 128>}, {pipeline_mode = #tpu.pipeline_mode<synchronous>, transform_indices = @transform_3, window_bounds = array<i64: 128, 128>}, {pipeline_mode = #tpu.pipeline_mode<synchronous>, transform_indices = @transform_4, window_bounds = array<i64: 1, 128>}, {transform_indices = @transform_5, window_bounds = array<i64: 8, 128>}]} {
    %c0 = arith.constant 0 : index
    %c0_0 = arith.constant 0 : index
    %0 = vector.load %arg1[%c0, %c0_0] : memref<8x32xbf16, #tpu.memory_space<vmem>>, vector<8x32xbf16>
    %c0_1 = arith.constant 0 : index
    %c0_2 = arith.constant 0 : index
    %1 = vector.load %arg2[%c0_1, %c0_2] : memref<32x128xbf16, #tpu.memory_space<vmem>>, vector<32x128xbf16>
    %cst = arith.constant dense<0.000000e+00> : vector<8x128xf32>
    %2 = tpu.matmul %0, %1, %cst {dimension_numbers = #tpu.dot_dimension_numbers<[1], [0], [0], [1], [0, 0, 1, 1], [], []>} : vector<8x32xbf16>, vector<32x128xbf16>, vector<8x128xf32> -> vector<8x128xf32>
    %c0_3 = arith.constant 0 : index
    %c0_4 = arith.constant 0 : index
    %3 = vector.load %arg3[%c0_3, %c0_4] : memref<1x128xf32, #tpu.memory_space<vmem>>, vector<1x128xf32>
    %4 = vector.broadcast %3 : vector<1x128xf32> to vector<8x128xf32>
    %5 = arith.addf %2, %4 : vector<8x128xf32>
    %cst_5 = arith.constant 0.000000e+00 : f32
    %6 = vector.broadcast %cst_5 : f32 to vector<8x128xf32>
    %7 = arith.maximumf %5, %6 : vector<8x128xf32>
    %8 = arith.truncf %7 : vector<8x128xf32> to vector<8x128xbf16>
    %c0_6 = arith.constant 0 : index
    %c0_7 = arith.constant 0 : index
    %9 = vector.load %arg4[%c0_6, %c0_7] : memref<128x128xbf16, #tpu.memory_space<vmem>>, vector<128x128xbf16>
    %cst_8 = arith.constant dense<0.000000e+00> : vector<8x128xf32>
    %10 = tpu.matmul %8, %9, %cst_8 {dimension_numbers = #tpu.dot_dimension_numbers<[1], [0], [0], [1], [0, 0, 1, 1], [], []>} : vector<8x128xbf16>, vector<128x128xbf16>, vector<8x128xf32> -> vector<8x128xf32>
    %c0_9 = arith.constant 0 : index
    %c0_10 = arith.constant 0 : index
    %11 = vector.load %arg5[%c0_9, %c0_10] : memref<1x128xf32, #tpu.memory_space<vmem>>, vector<1x128xf32>
    %12 = vector.broadcast %11 : vector<1x128xf32> to vector<8x128xf32>
    %13 = arith.addf %10, %12 : vector<8x128xf32>
    %c0_11 = arith.constant 0 : index
    %c0_12 = arith.constant 0 : index
    %14 = vector.load %arg6[%c0_11, %c0_12] : memref<8x128xf32, #tpu.memory_space<vmem>>, vector<8x128xf32>
    tpu.vector_store %arg6[%c0_11, %c0_12], %13 {strides = array<i32>} : memref<8x128xf32, #tpu.memory_space<vmem>>, vector<8x128xf32>,
    return
  }
  func.func @transform_0(%arg0: i32) -> (i32, i32) {
    %c0_i32 = arith.constant 0 : i32
    %c0_i32_0 = arith.constant 0 : i32
    return %arg0, %c0_i32 : i32, i32
  }
  func.func @transform_1(%arg0: i32) -> (i32, i32) {
    %c0_i32 = arith.constant 0 : i32
    %c0_i32_0 = arith.constant 0 : i32
    %c0_i32_1 = arith.constant 0 : i32
    return %c0_i32, %c0_i32_0 : i32, i32
  }
  func.func @transform_2(%arg0: i32) -> (i32, i32) {
    %c0_i32 = arith.constant 0 : i32
    %c0_i32_0 = arith.constant 0 : i32
    %c0_i32_1 = arith.constant 0 : i32
    return %c0_i32, %c0_i32_0 : i32, i32
  }
  func.func @transform_3(%arg0: i32) -> (i32, i32) {
    %c0_i32 = arith.constant 0 : i32
    %c0_i32_0 = arith.constant 0 : i32
    %c0_i32_1 = arith.constant 0 : i32
    return %c0_i32, %c0_i32_0 : i32, i32
  }
  func.func @transform_4(%arg0: i32) -> (i32, i32) {
    %c0_i32 = arith.constant 0 : i32
    %c0_i32_0 = arith.constant 0 : i32
    %c0_i32_1 = arith.constant 0 : i32
    return %c0_i32, %c0_i32_0 : i32, i32
  }
  func.func @transform_5(%arg0: i32) -> (i32, i32) {
    %c0_i32 = arith.constant 0 : i32
    %c0_i32_0 = arith.constant 0 : i32
    return %arg0, %c0_i32 : i32, i32
  }
}

</mosaic_0001>

<llo_original>
// kernel: tpu_custom_call.1
$region0: #{tpu_custom_call.1}
  #allocation0 [shape = 'u32[]', space=smem, size = 0x4, offset = 0x4, fixed_abs, tag = 'smem constant byte address 0x4 - core index']
  #allocation1 [shape = 'u32[72,128]{1,0:T(1,128)}', space=vmem, size = 0x9000, scoped, tag = 'internal scratch']
  %s0 = inlined_call_operand.hbm [shape: bf16[8,32], index: 0, kind: input, shape index: {}]
  %s1 = inlined_call_operand.hbm [shape: bf16[32,128], index: 1, kind: input, shape index: {}]
  %s2 = inlined_call_operand.vmem [shape: f32[1,128], index: 2, kind: input, shape index: {}]
  %s3 = inlined_call_operand.hbm [shape: bf16[128,128], index: 3, kind: input, shape index: {}]
  %s4 = inlined_call_operand.vmem [shape: f32[1,128], index: 4, kind: input, shape index: {}]
  %s5 = inlined_call_operand.hbm [shape: f32[8,128], index: 5, kind: output, shape index: {}]
  %s6 = sld [smem:[#allocation0]]
  $region42: #{tpu_custom_call.1} parent=0
    _
  %s8 = ssub.s32 1, %s6
  %s9 = scalar_select 0, %s8, %s6
  $region1: #{tpu_custom_call.1} parent=0
    #allocation2 [shape = 'u8[2048]{0}', space=vmem, size = 0x800, scoped, tag = 'input window, operand 0, single buffered']
    #allocation3 [shape = 's32[1]{0}', space=sflag, size = 0x4, scoped, tag = 'scoped memory for tpu_custom_call.1']
    #allocation4 [shape = 's32[1]{0}', space=sflag, size = 0x4, scoped, tag = 'scoped memory for tpu_custom_call.1']
    #allocation5 [shape = 'u8[8192]{0}', space=vmem, size = 0x2000, scoped, tag = 'input window, operand 1, single buffered']
    #allocation6 [shape = 's32[1]{0}', space=sflag, size = 0x4, scoped, tag = 'scoped memory for tpu_custom_call.1']
    #allocation7 [shape = 'u8[32768]{0}', space=vmem, size = 0x8000, scoped, tag = 'input window, operand 3, single buffered']
    #allocation8 [shape = 'u8[4096]{0}', space=vmem, size = 0x1000, scoped, tag = 'output window, operand 0, single buffered']
    %10 = vsyncpa [#allocation3], 0
    %11 = vsyncpa [#allocation6], 0
    %12 = vsyncpa [#allocation4], 0
    // Predicated region
    $region2: #{tpu_custom_call.1} parent=1 // pred_check
      _
    $region3: #{tpu_custom_call.1} parent=1 // pred_check_branch
      %14 = sbr.rel (0) target = $region5
    $region4: #{tpu_custom_call.1} parent=1 // pred_region
      %16 = vsyncadd [#allocation3], 0
      %s18 = sshll.u32 %s0, 4
      %s19 = int_to_ptr.hbm [resolvable:$true] %s18
      %s20 = sshll.u32 [#allocation2], 4
      %s21 = int_to_ptr.vmem [resolvable:$true] %s20
      %23 = dma.hbm_to_vmem [thread:$0]  %s19, 64, %s21, [#allocation3]
    $region5: #{tpu_custom_call.1} parent=1 // pred_fallthru
      _
    // Predicated region
    $region6: #{tpu_custom_call.1} parent=1 // pred_check
      _
    $region7: #{tpu_custom_call.1} parent=1 // pred_check_branch
      %25 = sbr.rel (0) target = $region9
    $region8: #{tpu_custom_call.1} parent=1 // pred_region
      %27 = vsyncadd [#allocation6], 0
      %s28 = sshll.u32 %s1, 4
      %s29 = int_to_ptr.hbm [resolvable:$true] %s28
      %s30 = sshll.u32 [#allocation5], 4
      %s31 = int_to_ptr.vmem [resolvable:$true] %s30
      %36 = dma.hbm_to_vmem [thread:$0]  %s29, 256, %s31, [#allocation6], 64, 64, 4
    $region9: #{tpu_custom_call.1} parent=1 // pred_fallthru
      _
    // Predicated region
    $region10: #{tpu_custom_call.1} parent=1 // pred_check
      _
    $region11: #{tpu_custom_call.1} parent=1 // pred_check_branch
      %38 = sbr.rel (0) target = $region13
    $region12: #{tpu_custom_call.1} parent=1 // pred_region
      _
    $region13: #{tpu_custom_call.1} parent=1 // pred_fallthru
      _
    // Predicated region
    $region14: #{tpu_custom_call.1} parent=1 // pred_check
      _
    $region15: #{tpu_custom_call.1} parent=1 // pred_check_branch
      %40 = sbr.rel (0) target = $region17
    $region16: #{tpu_custom_call.1} parent=1 // pred_region
      %42 = vsyncadd [#allocation6], 0
      %s43 = sshll.u32 %s3, 4
      %s44 = int_to_ptr.hbm [resolvable:$true] %s43
      %s45 = sshll.u32 [#allocation7], 4
      %s46 = int_to_ptr.vmem [resolvable:$true] %s45
      %51 = dma.hbm_to_vmem [thread:$0]  %s44, 1024, %s46, [#allocation6], 64, 64, 4
    $region17: #{tpu_custom_call.1} parent=1 // pred_fallthru
      _
    // Predicated region
    $region18: #{tpu_custom_call.1} parent=1 // pred_check
      _
    $region19: #{tpu_custom_call.1} parent=1 // pred_check_branch
      %53 = sbr.rel (0) target = $region21
    $region20: #{tpu_custom_call.1} parent=1 // pred_region
      _
    $region21: #{tpu_custom_call.1} parent=1 // pred_fallthru
      _
    // Predicated region
    $region22: #{tpu_custom_call.1} parent=1 // pred_check
      _
    $region23: #{tpu_custom_call.1} parent=1 // pred_check_branch
      %55 = sbr.rel (0) target = $region25
    $region24: #{tpu_custom_call.1} parent=1 // pred_region
      %57 = dma.done [#allocation3], 64
    $region25: #{tpu_custom_call.1} parent=1 // pred_fallthru
      _
    // Predicated region
    $region26: #{tpu_custom_call.1} parent=1 // pred_check
      _
    $region27: #{tpu_custom_call.1} parent=1 // pred_check_branch
      %59 = sbr.rel (0) target = $region29
    $region28: #{tpu_custom_call.1} parent=1 // pred_region
      %61 = dma.done [#allocation6], 256
    $region29: #{tpu_custom_call.1} parent=1 // pred_fallthru
      _
    // Predicated region
    $region30: #{tpu_custom_call.1} parent=1 // pred_check
      _
    $region31: #{tpu_custom_call.1} parent=1 // pred_check_branch
      %63 = sbr.rel (0) target = $region33
    $region32: #{tpu_custom_call.1} parent=1 // pred_region
      %65 = dma.done [#allocation6], 1024
    $region33: #{tpu_custom_call.1} parent=1 // pred_fallthru
      _
    %v67 = vld [vmem:[#allocation2] sm:$0xf]
    %v68 = vld [vmem:[#allocation5] sm:$0xf]
    %v69 = vld [vmem:[#allocation5 + $0x4] sm:$0xf]
    %v70 = vld [vmem:[#allocation5 + $0x8] sm:$0xf]
    %v71 = vld [vmem:[#allocation5 + $0xc] sm:$0xf]
    %v72 = vld [vmem:[%s2] sm:$0x1]
    %v74 = vperm.slane %v72, 0
    %v80 = vunpack.c.l.b16 %v68
    %v81 = vunpack.c.l.b16 %v69
    %v82 = vunpack.c.l.b16 %v70
    %v83 = vunpack.c.l.b16 %v71
    %v84 = vpack.c.b16 %v81, %v80
    %v85 = vpack.c.b16 %v83, %v82
    %vm88 = vcmask 261120
    %v90 = vsel %vm88, %v67, 0
    %92 = vmatpush.bf16.msra.mxu0 0
    %93 = vmatpush.bf16.msra.mxu0 0
    %94 = vmatpush.bf16.msra.mxu0 0
    %95 = vmatpush.bf16.msra.mxu0 0
    %96 = vmatpush.bf16.msra.mxu0 0
    %97 = vmatpush.bf16.msra.mxu0 0
    %98 = vmatpush.bf16.msra.mxu0 %v85
    %99 = vmatpush.bf16.msra.mxu0 %v84
    %100 = vmatmul.bf16.gmra.mxu0 %v90
    %v101 = vpop.f32.mrf.mxu0
    %v102 = vadd.f32 %v74, %v101
    %v103 = vpop.f32.mrf.mxu0
    %104 = vdwg.mxu0
    %v105 = vmax.f32 %v102, 0.0
    %v106 = vpack.c.bf16 %v105, %v105
    %v107 = vld [vmem:[#allocation7] sm:$0xf]
    %v108 = vld [vmem:[#allocation7 + $0x4] sm:$0xf]
    %v109 = vld [vmem:[#allocation7 + $0x8] sm:$0xf]
    %v110 = vld [vmem:[#allocation7 + $0xc] sm:$0xf]
    %v111 = vld [vmem:[#allocation7 + $0x10] sm:$0xf]
    %v112 = vld [vmem:[#allocation7 + $0x14] sm:$0xf]
    %v113 = vld [vmem:[#allocation7 + $0x18] sm:$0xf]
    %v114 = vld [vmem:[#allocation7 + $0x1c] sm:$0xf]
    %v115 = vld [vmem:[#allocation7 + $0x20] sm:$0xf]
    %v116 = vld [vmem:[#allocation7 + $0x24] sm:$0xf]
    %v117 = vld [vmem:[#allocation7 + $0x28] sm:$0xf]
    %v118 = vld [vmem:[#allocation7 + $0x2c] sm:$0xf]
    %v119 = vld [vmem:[#allocation7 + $0x30] sm:$0xf]
    %v120 = vld [vmem:[#allocation7 + $0x34] sm:$0xf]
    %v121 = vld [vmem:[#allocation7 + $0x38] sm:$0xf]
    %v122 = vld [vmem:[#allocation7 + $0x3c] sm:$0xf]
    %v123 = vld [vmem:[%s4] sm:$0x1]
    %v125 = vperm.slane %v123, 0
    %v143 = vunpack.c.l.b16 %v107
    %v144 = vunpack.c.l.b16 %v108
    %v145 = vunpack.c.l.b16 %v109
    %v146 = vunpack.c.l.b16 %v110
    %v147 = vunpack.c.l.b16 %v111
    %v148 = vunpack.c.l.b16 %v112
    %v149 = vunpack.c.l.b16 %v113
    %v150 = vunpack.c.l.b16 %v114
    %v151 = vunpack.c.l.b16 %v115
    %v152 = vunpack.c.l.b16 %v116
    %v153 = vunpack.c.l.b16 %v117
    %v154 = vunpack.c.l.b16 %v118
    %v155 = vunpack.c.l.b16 %v119
    %v156 = vunpack.c.l.b16 %v120
    %v157 = vunpack.c.l.b16 %v121
    %v158 = vunpack.c.l.b16 %v122
    %v159 = vpack.c.b16 %v144, %v143
    %v160 = vpack.c.b16 %v146, %v145
    %v161 = vpack.c.b16 %v148, %v147
    %v162 = vpack.c.b16 %v150, %v149
    %v163 = vpack.c.b16 %v152, %v151
    %v164 = vpack.c.b16 %v154, %v153
    %v165 = vpack.c.b16 %v156, %v155
    %v166 = vpack.c.b16 %v158, %v157
    %175 = vmatpush.bf16.msra.mxu0 %v166
    %176 = vmatpush.bf16.msra.mxu0 %v165
    %177 = vmatpush.bf16.msra.mxu0 %v164
    %178 = vmatpush.bf16.msra.mxu0 %v163
    %179 = vmatpush.bf16.msra.mxu0 %v162
    %180 = vmatpush.bf16.msra.mxu0 %v161
    %181 = vmatpush.bf16.msra.mxu0 %v160
    %182 = vmatpush.bf16.msra.mxu0 %v159
    %183 = vmatmul.bf16.gmra.mxu0 %v106
    %v184 = vpop.f32.mrf.mxu0
    %v185 = vadd.f32 %v125, %v184
    %v186 = vpop.f32.mrf.mxu0
    %187 = vdwg.mxu0
    %188 = vst [vmem:[#allocation8] sm:$0xff] %v185
    // Predicated region
    $region34: #{tpu_custom_call.1} parent=1 // pred_check
      _
    $region35: #{tpu_custom_call.1} parent=1 // pred_check_branch
      %190 = sbr.rel (0) target = $region37
    $region36: #{tpu_custom_call.1} parent=1 // pred_region
      %192 = vsyncadd [#allocation4], 0
      %s194 = sshll.u32 [#allocation8], 4
      %s195 = int_to_ptr.vmem [resolvable:$true] %s194
      %s196 = sshll.u32 %s5, 4
      %s197 = int_to_ptr.hbm [resolvable:$true] %s196
      %199 = dma.vmem_to_hbm [thread:$0]  %s195, 128, %s197, [#allocation4]
    $region37: #{tpu_custom_call.1} parent=1 // pred_fallthru
      _
    // Predicated region
    $region38: #{tpu_custom_call.1} parent=1 // pred_check
      _
    $region39: #{tpu_custom_call.1} parent=1 // pred_check_branch
      %201 = sbr.rel (0) target = $region41
    $region40: #{tpu_custom_call.1} parent=1 // pred_region
      %203 = dma.done [#allocation4], 128
    $region41: #{tpu_custom_call.1} parent=1 // pred_fallthru
      _
    %204 = vsyncpa [#allocation3], 1
    %205 = vsyncpa [#allocation6], 1
    %206 = vsyncpa [#allocation4], 1

// kernel: tpu_custom_call.1
$region0: #{tpu_custom_call.1}
  #allocation0 [shape = 'u32[]', space=smem, size = 0x4, offset = 0x4, fixed_abs, tag = 'smem constant byte address 0x4 - core index']
  #allocation1 [shape = 'u32[72,128]{1,0:T(1,128)}', space=vmem, size = 0x9000, scoped, tag = 'internal scratch']
  %s0 = inlined_call_operand.hbm [shape: bf16[8,32], index: 0, kind: input, shape index: {}]
  %s1 = inlined_call_operand.hbm [shape: bf16[32,128], index: 1, kind: input, shape index: {}]
  %s2 = inlined_call_operand.vmem [shape: f32[1,128], index: 2, kind: input, shape index: {}]
  %s3 = inlined_call_operand.hbm [shape: bf16[128,128], index: 3, kind: input, shape index: {}]
  %s4 = inlined_call_operand.vmem [shape: f32[1,128], index: 4, kind: input, shape index: {}]
  %s5 = inlined_call_operand.hbm [shape: f32[8,128], index: 5, kind: output, shape index: {}]
  %s6 = sld [smem:[#allocation0]]
  $region42: #{tpu_custom_call.1} parent=0
    _
  %s8 = ssub.s32 1, %s6
  %s9 = scalar_select 0, %s8, %s6
  $region1: #{tpu_custom_call.1} parent=0
    #allocation2 [shape = 'u8[2048]{0}', space=vmem, size = 0x800, scoped, tag = 'input window, operand 0, single buffered']
    #allocation3 [shape = 's32[1]{0}', space=sflag, size = 0x4, scoped, tag = 'scoped memory for tpu_custom_call.1']
    #allocation4 [shape = 's32[1]{0}', space=sflag, size = 0x4, scoped, tag = 'scoped memory for tpu_custom_call.1']
    #allocation5 [shape = 'u8[8192]{0}', space=vmem, size = 0x2000, scoped, tag = 'input window, operand 1, single buffered']
    #allocation6 [shape = 's32[1]{0}', space=sflag, size = 0x4, scoped, tag = 'scoped memory for tpu_custom_call.1']
    #allocation7 [shape = 'u8[32768]{0}', space=vmem, size = 0x8000, scoped, tag = 'input window, operand 3, single buffered']
    #allocation8 [shape = 'u8[4096]{0}', space=vmem, size = 0x1000, scoped, tag = 'output window, operand 0, single buffered']
    %10 = vsyncpa [#allocation3], 0
    %11 = vsyncpa [#allocation6], 0
    %12 = vsyncpa [#allocation4], 0
    // Predicated region
    $region2: #{tpu_custom_call.1} parent=1 // pred_check
      _
    $region3: #{tpu_custom_call.1} parent=1 // pred_check_branch
      %14 = sbr.rel (0) target = $region5
    $region4: #{tpu_custom_call.1} parent=1 // pred_region
      %16 = vsyncadd [#allocation3], 0
      %s18 = sshll.u32 %s0, 4
      %s19 = int_to_ptr.hbm [resolvable:$true] %s18
      %s20 = sshll.u32 [#allocation2], 4
      %s21 = int_to_ptr.vmem [resolvable:$true] %s20
      %23 = dma.hbm_to_vmem [thread:$0]  %s19, 64, %s21, [#allocation3]
    $region5: #{tpu_custom_call.1} parent=1 // pred_fallthru
      _
    // Predicated region
    $region6: #{tpu_custom_call.1} parent=1 // pred_check
      _
    $region7: #{tpu_custom_call.1} parent=1 // pred_check_branch
      %25 = sbr.rel (0) target = $region9
    $region8: #{tpu_custom_call.1} parent=1 // pred_region
      %27 = vsyncadd [#allocation6], 0
      %s28 = sshll.u32 %s1, 4
      %s29 = int_to_ptr.hbm [resolvable:$true] %s28
      %s30 = sshll.u32 [#allocation5], 4
      %s31 = int_to_ptr.vmem [resolvable:$true] %s30
      %36 = dma.hbm_to_vmem [thread:$0]  %s29, 256, %s31, [#allocation6], 64, 64, 4
    $region9: #{tpu_custom_call.1} parent=1 // pred_fallthru
      _
    // Predicated region
    $region10: #{tpu_custom_call.1} parent=1 // pred_check
      _
    $region11: #{tpu_custom_call.1} parent=1 // pred_check_branch
      %38 = sbr.rel (0) target = $region13
    $region12: #{tpu_custom_call.1} parent=1 // pred_region
      _
    $region13: #{tpu_custom_call.1} parent=1 // pred_fallthru
      _
    // Predicated region
    $region14: #{tpu_custom_call.1} parent=1 // pred_check
      _
    $region15: #{tpu_custom_call.1} parent=1 // pred_check_branch
      %40 = sbr.rel (0) target = $region17
    $region16: #{tpu_custom_call.1} parent=1 // pred_region
      %42 = vsyncadd [#allocation6], 0
      %s43 = sshll.u32 %s3, 4
      %s44 = int_to_ptr.hbm [resolvable:$true] %s43
      %s45 = sshll.u32 [#allocation7], 4
      %s46 = int_to_ptr.vmem [resolvable:$true] %s45
      %51 = dma.hbm_to_vmem [thread:$0]  %s44, 1024, %s46, [#allocation6], 64, 64, 4
    $region17: #{tpu_custom_call.1} parent=1 // pred_fallthru
      _
    // Predicated region
    $region18: #{tpu_custom_call.1} parent=1 // pred_check
      _
    $region19: #{tpu_custom_call.1} parent=1 // pred_check_branch
      %53 = sbr.rel (0) target = $region21
    $region20: #{tpu_custom_call.1} parent=1 // pred_region
      _
    $region21: #{tpu_custom_call.1} parent=1 // pred_fallthru
      _
    // Predicated region
    $region22: #{tpu_custom_call.1} parent=1 // pred_check
      _
    $region23: #{tpu_custom_call.1} parent=1 // pred_check_branch
      %55 = sbr.rel (0) target = $region25
    $region24: #{tpu_custom_call.1} parent=1 // pred_region
      %57 = dma.done [#allocation3], 64
    $region25: #{tpu_custom_call.1} parent=1 // pred_fallthru
      _
    // Predicated region
    $region26: #{tpu_custom_call.1} parent=1 // pred_check
      _
    $region27: #{tpu_custom_call.1} parent=1 // pred_check_branch
      %59 = sbr.rel (0) target = $region29
    $region28: #{tpu_custom_call.1} parent=1 // pred_region
      %61 = dma.done [#allocation6], 256
    $region29: #{tpu_custom_call.1} parent=1 // pred_fallthru
      _
    // Predicated region
    $region30: #{tpu_custom_call.1} parent=1 // pred_check
      _
    $region31: #{tpu_custom_call.1} parent=1 // pred_check_branch
      %63 = sbr.rel (0) target = $region33
    $region32: #{tpu_custom_call.1} parent=1 // pred_region
      %65 = dma.done [#allocation6], 1024
    $region33: #{tpu_custom_call.1} parent=1 // pred_fallthru
      _
    %v67 = vld [vmem:[#allocation2] sm:$0xf]
    %v68 = vld [vmem:[#allocation5] sm:$0xf]
    %v69 = vld [vmem:[#allocation5 + $0x4] sm:$0xf]
    %v70 = vld [vmem:[#allocation5 + $0x8] sm:$0xf]
    %v71 = vld [vmem:[#allocation5 + $0xc] sm:$0xf]
    %v72 = vld [vmem:[%s2] sm:$0x1]
    %v74 = vperm.slane %v72, 0
    %v80 = vunpack.c.l.b16 %v68
    %v81 = vunpack.c.l.b16 %v69
    %v82 = vunpack.c.l.b16 %v70
    %v83 = vunpack.c.l.b16 %v71
    %v84 = vpack.c.b16 %v81, %v80
    %v85 = vpack.c.b16 %v83, %v82
    %vm88 = vcmask 261120
    %v90 = vsel %vm88, %v67, 0
    %92 = vmatpush.bf16.msra.mxu0 0
    %93 = vmatpush.bf16.msra.mxu0 0
    %94 = vmatpush.bf16.msra.mxu0 0
    %95 = vmatpush.bf16.msra.mxu0 0
    %96 = vmatpush.bf16.msra.mxu0 0
    %97 = vmatpush.bf16.msra.mxu0 0
    %98 = vmatpush.bf16.msra.mxu0 %v85
    %99 = vmatpush.bf16.msra.mxu0 %v84
    %100 = vmatmul.bf16.gmra.mxu0 %v90
    %v101 = vpop.f32.mrf.mxu0
    %v102 = vadd.f32 %v74, %v101
    %v103 = vpop.f32.mrf.mxu0
    %104 = vdwg.mxu0
    %v105 = vmax.f32 %v102, 0.0
    %v106 = vpack.c.bf16 %v105, %v105
    %v107 = vld [vmem:[#allocation7] sm:$0xf]
    %v108 = vld [vmem:[#allocation7 + $0x4] sm:$0xf]
    %v109 = vld [vmem:[#allocation7 + $0x8] sm:$0xf]
    %v110 = vld [vmem:[#allocation7 + $0xc] sm:$0xf]
    %v111 = vld [vmem:[#allocation7 + $0x10] sm:$0xf]
    %v112 = vld [vmem:[#allocation7 + $0x14] sm:$0xf]
    %v113 = vld [vmem:[#allocation7 + $0x18] sm:$0xf]
    %v114 = vld [vmem:[#allocation7 + $0x1c] sm:$0xf]
    %v115 = vld [vmem:[#allocation7 + $0x20] sm:$0xf]
    %v116 = vld [vmem:[#allocation7 + $0x24] sm:$0xf]
    %v117 = vld [vmem:[#allocation7 + $0x28] sm:$0xf]
    %v118 = vld [vmem:[#allocation7 + $0x2c] sm:$0xf]
    %v119 = vld [vmem:[#allocation7 + $0x30] sm:$0xf]
    %v120 = vld [vmem:[#allocation7 + $0x34] sm:$0xf]
    %v121 = vld [vmem:[#allocation7 + $0x38] sm:$0xf]
    %v122 = vld [vmem:[#allocation7 + $0x3c] sm:$0xf]
    %v123 = vld [vmem:[%s4] sm:$0x1]
    %v125 = vperm.slane %v123, 0
    %v143 = vunpack.c.l.b16 %v107
    %v144 = vunpack.c.l.b16 %v108
    %v145 = vunpack.c.l.b16 %v109
    %v146 = vunpack.c.l.b16 %v110
    %v147 = vunpack.c.l.b16 %v111
    %v148 = vunpack.c.l.b16 %v112
    %v149 = vunpack.c.l.b16 %v113
    %v150 = vunpack.c.l.b16 %v114
    %v151 = vunpack.c.l.b16 %v115
    %v152 = vunpack.c.l.b16 %v116
    %v153 = vunpack.c.l.b16 %v117
    %v154 = vunpack.c.l.b16 %v118
    %v155 = vunpack.c.l.b16 %v119
    %v156 = vunpack.c.l.b16 %v120
    %v157 = vunpack.c.l.b16 %v121
    %v158 = vunpack.c.l.b16 %v122
    %v159 = vpack.c.b16 %v144, %v143
    %v160 = vpack.c.b16 %v146, %v145
    %v161 = vpack.c.b16 %v148, %v147
    %v162 = vpack.c.b16 %v150, %v149
    %v163 = vpack.c.b16 %v152, %v151
    %v164 = vpack.c.b16 %v154, %v153
    %v165 = vpack.c.b16 %v156, %v155
    %v166 = vpack.c.b16 %v158, %v157
    %175 = vmatpush.bf16.msra.mxu0 %v166
    %176 = vmatpush.bf16.msra.mxu0 %v165
    %177 = vmatpush.bf16.msra.mxu0 %v164
    %178 = vmatpush.bf16.msra.mxu0 %v163
    %179 = vmatpush.bf16.msra.mxu0 %v162
    %180 = vmatpush.bf16.msra.mxu0 %v161
    %181 = vmatpush.bf16.msra.mxu0 %v160
    %182 = vmatpush.bf16.msra.mxu0 %v159
    %183 = vmatmul.bf16.gmra.mxu0 %v106
    %v184 = vpop.f32.mrf.mxu0
    %v185 = vadd.f32 %v125, %v184
    %v186 = vpop.f32.mrf.mxu0
    %187 = vdwg.mxu0
    %188 = vst [vmem:[#allocation8] sm:$0xff] %v185
    // Predicated region
    $region34: #{tpu_custom_call.1} parent=1 // pred_check
      _
    $region35: #{tpu_custom_call.1} parent=1 // pred_check_branch
      %190 = sbr.rel (0) target = $region37
    $region36: #{tpu_custom_call.1} parent=1 // pred_region
      %192 = vsyncadd [#allocation4], 0
      %s194 = sshll.u32 [#allocation8], 4
      %s195 = int_to_ptr.vmem [resolvable:$true] %s194
      %s196 = sshll.u32 %s5, 4
      %s197 = int_to_ptr.hbm [resolvable:$true] %s196
      %199 = dma.vmem_to_hbm [thread:$0]  %s195, 128, %s197, [#allocation4]
    $region37: #{tpu_custom_call.1} parent=1 // pred_fallthru
      _
    // Predicated region
    $region38: #{tpu_custom_call.1} parent=1 // pred_check
      _
    $region39: #{tpu_custom_call.1} parent=1 // pred_check_branch
      %201 = sbr.rel (0) target = $region41
    $region40: #{tpu_custom_call.1} parent=1 // pred_region
      %203 = dma.done [#allocation4], 128
    $region41: #{tpu_custom_call.1} parent=1 // pred_fallthru
      _
    %204 = vsyncpa [#allocation3], 1
    %205 = vsyncpa [#allocation6], 1
    %206 = vsyncpa [#allocation4], 1

</llo_original>
